<compile_context>
chip_gen: v7x
topology: tpu7x:2x2x1
jax: 0.10.0
libtpu: 0.0.40
codegen_flags: <defaults>
</compile_context>

<pallas_src>
import math
from functools import partial

import jax
import jax.numpy as jnp
from jax.experimental import pallas as pl
from jax.experimental.pallas import tpu as pltpu


_LANES = 128
_MAX_TILE_PACKED_ROWS = 4096   # ~4 MiB f32 output block per step
_MIN_TILE_PACKED_ROWS = 1024   # keep per-step overhead << step DMA time
_TARGET_GRID_STEPS = 8         # enough steps to feed 2 TCs + double-buffer
_XLA_FALLBACK_ROWS = 8192      # below this many rows the fused XLA path wins


def _round_up(a: int, m: int) -> int:
    return ((a + m - 1) // m) * m


def _pack_factor(num_bands: int, lanes: int = _LANES) -> int:
    """Rows packed per vreg row so P*num_bands fills the lane dimension."""
    return max(1, lanes // num_bands)


def make_projection(B: jax.Array, lanes: int = _LANES) -> jax.Array:
    """Fold 2*pi into B and build the block-diagonal packed projection matrix
    once, at buffer-creation time.  B: (dim, num_bands) ->
    (P*dim, P*num_bands) with 2*pi*B repeated on the diagonal.

    lanes=256 (P=8) half-fills fewer packed rows and better feeds the 256x256
    MXUs on v6e/v7x; lanes=128 is the safe default on all generations."""
    num_bands = B.shape[1]
    p = _pack_factor(num_bands, lanes)
    b_scaled = (2.0 * jnp.pi) * B.astype(jnp.float32)
    return jnp.kron(jnp.eye(p, dtype=jnp.float32), b_scaled)


def _gff_kernel(xp_ref, bb_ref, out_ref):
    # xp_ref:  (TILE, P*dim)          packed input rows            (VMEM)
    # bb_ref:  (P*dim, P*num_bands)   block-diagonal 2*pi*B        (VMEM)
    # out_ref: (TILE, 2*P*num_bands)  lane-dense [sin | cos] slab  (VMEM)
    proj = jnp.dot(xp_ref[...], bb_ref[...], preferred_element_type=jnp.float32)
    pnb = bb_ref.shape[-1]
    # Both static slices are 128-lane multiples for num_bands in {32,64,128},
    # so the stores are full-width and unmasked.
    # TODO(synk): on v7x (VPU-bound regime at 3.2 TB/s HBM) share the sin/cos
    # range reduction instead of two independent jnp.sin/jnp.cos evaluations.
    out_ref[:, :pnb] = jnp.sin(proj).astype(out_ref.dtype)
    out_ref[:, pnb:] = jnp.cos(proj).astype(out_ref.dtype)


def _pick_tile(n_packed: int) -> int:
    """Packed-row tile: as large as 4096, but keep ~>=8 grid steps when the
    input is big enough, and never larger than the (8-rounded) input."""
    target = _round_up(-(-n_packed // _TARGET_GRID_STEPS), 8)
    tile = max(_MIN_TILE_PACKED_ROWS, min(_MAX_TILE_PACKED_ROWS, target))
    return min(tile, _round_up(n_packed, 8))


def _sincos_packed_2d(x2d, B_block, out_dtype):
    """Pallas path: x2d (n, dim) -> (sin2d, cos2d), each (n, num_bands)."""
    n, dim = x2d.shape
    pd, pnb = B_block.shape
    p = pd // dim
    num_bands = pnb // p

    n_packed = -(-n // p)
    tile = _pick_tile(n_packed)
    n_packed_pad = _round_up(n_packed, tile)
    n_pad = n_packed_pad * p
    if n_pad != n:
        # Tail-only pad; avoids a full-array zero-fill + scatter pass.
        x2d = jnp.pad(x2d, ((0, n_pad - n), (0, 0)))
    x_packed = x2d.reshape(n_packed_pad, p * dim)

    grid = (n_packed_pad // tile,)
    out_itemsize = jnp.dtype(out_dtype).itemsize
    cost = pl.CostEstimate(
        flops=2 * n_packed_pad * pd * pnb,
        transcendentals=2 * n_packed_pad * pnb,
        bytes_accessed=(n_packed_pad * pd * 4
                        + pd * pnb * 4
                        + n_packed_pad * 2 * pnb * out_itemsize),
    )

    slab = pl.pallas_call(
        _gff_kernel,
        out_shape=jax.ShapeDtypeStruct((n_packed_pad, 2 * pnb), out_dtype),
        grid=grid,
        in_specs=[
            pl.BlockSpec((tile, pd), lambda i: (i, 0)),
            pl.BlockSpec((pd, pnb), lambda i: (0, 0)),
        ],
        out_specs=pl.BlockSpec((tile, 2 * pnb), lambda i: (i, 0)),
        compiler_params=pltpu.CompilerParams(
            dimension_semantics=("parallel",),
            vmem_limit_bytes=32 * 1024 * 1024,   # v5e scoped default is 16 MiB
        ),
        cost_estimate=cost,
    )(x_packed, B_block)

    # Unpack the lane-packed [sin | cos] slab back to per-row layout (layout
    # plumbing only; fused by XLA into the consumer of these arrays).  The
    # [:n] slice also drops the garbage rows produced by padding.
    sin2d = slab[:, :pnb].reshape(n_pad, num_bands)[:n]
    cos2d = slab[:, pnb:].reshape(n_pad, num_bands)[:n]
    return sin2d, cos2d


def _sincos_2d(x2d, B_block, out_dtype, force_kernel):
    n, dim = x2d.shape
    pd, pnb = B_block.shape
    p = pd // dim
    num_bands = pnb // p
    if (not force_kernel) and n < _XLA_FALLBACK_ROWS:
        # Tiny inputs: fixed pallas_call dispatch + pad/pack would dominate;
        # the fused XLA path is strictly faster.  Top-left block of the
        # kron'd matrix is exactly 2*pi*B, so no extra scale here.
        proj = x2d @ B_block[:dim, :num_bands]
        return jnp.sin(proj).astype(out_dtype), jnp.cos(proj).astype(out_dtype)
    return _sincos_packed_2d(x2d, B_block, out_dtype)


@partial(jax.jit, static_argnames=("force_kernel", "out_dtype"))
def gaussian_fourier_features(x, B_block, *, force_kernel=False,
                              out_dtype=jnp.float32):
    """x: (..., dim); B_block = make_projection(B).
    Returns (..., dim + 2*num_bands) matching
    torch.cat([x, sin(2*pi*x@B), cos(2*pi*x@B)], -1)."""
    pd, pnb = B_block.shape
    dim = x.shape[-1]
    p = pd // dim
    num_bands = pnb // p
    out_dim = dim + 2 * num_bands

    lead = x.shape[:-1]
    n = math.prod(lead)            # math.prod(()) == 1
    x2d = x.reshape(n, dim).astype(jnp.float32)

    sin2d, cos2d = _sincos_2d(x2d, B_block, out_dtype, force_kernel)
    out = jnp.concatenate([x2d.astype(out_dtype), sin2d, cos2d], axis=-1)
    return out.reshape(*lead, out_dim)


def gaussian_fourier_features_parts(x, B_block, *, force_kernel=False,
                                    out_dtype=jnp.float32):
    """Same math, but returns (x, sin, cos) separately so the consumer can
    fuse the concat itself — this avoids the extra HBM read+write pass that
    materialising the (..., dim + 2*num_bands) layout costs."""
    pd, pnb = B_block.shape
    dim = x.shape[-1]
    p = pd // dim
    num_bands = pnb // p
    lead = x.shape[:-1]
    n = math.prod(lead)
    x2d = x.reshape(n, dim).astype(jnp.float32)
    sin2d, cos2d = _sincos_2d(x2d, B_block, out_dtype, force_kernel)
    return (x2d.reshape(*lead, dim),
            sin2d.reshape(*lead, num_bands),
            cos2d.reshape(*lead, num_bands))


def reference(x, B):
    proj = 2.0 * jnp.pi * (x @ B)
    return jnp.concatenate([x, jnp.sin(proj), jnp.cos(proj)], axis=-1)


if __name__ == "__main__":
    # Config-equivalent hyperparameters (synthetic, deterministic).
    pos_encoding_freq = 10.0
    pos_encoding_band = 32   # num_bands
    pos_input_dim = 4        # dimensionality

    key = jax.random.PRNGKey(0)
    k_b, k_x1, k_x2, k_x3 = jax.random.split(key, 4)

    # register_buffer('B', randn(dim, num_bands) * freq)
    B = jax.random.normal(k_b, (pos_input_dim, pos_encoding_band),
                          dtype=jnp.float32) * pos_encoding_freq
    B_block = make_projection(B)   # built once; 2*pi folded in

    expected_out_dim = pos_encoding_band * 2 + pos_input_dim

    def check(x, force_kernel):
        out = jax.block_until_ready(
            gaussian_fourier_features(x, B_block, force_kernel=force_kernel))
        ref = reference(x, B)
        assert out.shape == x.shape[:-1] + (expected_out_dim,), out.shape
        assert jnp.allclose(out, ref, atol=1e-3, rtol=1e-3), (
            float(jnp.max(jnp.abs(out - ref))))

    # Small input (batch=2, seq=8, dim=4): forced kernel path exercises the
    # packing / row-padding / single-tile code, then the auto (XLA) path.
    x_small = jax.random.normal(k_x1, (2, 8, pos_input_dim), dtype=jnp.float32)
    check(x_small, force_kernel=True)
    check(x_small, force_kernel=False)

    # Medium input: exercises a non-trivial tile size with no row padding.
    x_mid = jax.random.normal(k_x2, (4, 1000, pos_input_dim), dtype=jnp.float32)
    check(x_mid, force_kernel=True)

    # Larger input: crosses the auto-kernel threshold and runs a multi-step
    # ("parallel") grid with the adaptive tile.
    x_big = jax.random.normal(k_x3, (4, 4096, pos_input_dim), dtype=jnp.float32)
    check(x_big, force_kernel=False)

    print("KERNEL_OK")
</pallas_src>

<mosaic_0001>
module attributes {stable_mosaic.version = 11 : i64} {
  func.func @_gff_kernel(%arg0: i32, %arg1: memref<8x16xf32, #tpu.memory_space<vmem>>, %arg2: memref<16x128xf32, #tpu.memory_space<vmem>>, %arg3: memref<8x256xf32, #tpu.memory_space<vmem>>) attributes {dimension_semantics = [#tpu.dimension_semantics<parallel>], iteration_bounds = array<i64: 1>, scalar_prefetch = 0 : i64, scratch_operands = 0 : i64, tpu.core_type = #tpu.core_type<tc>, window_params = [{transform_indices = @transform_0, window_bounds = array<i64: 8, 16>}, {pipeline_mode = #tpu.pipeline_mode<synchronous>, transform_indices = @transform_1, window_bounds = array<i64: 16, 128>}, {transform_indices = @transform_2, window_bounds = array<i64: 8, 256>}]} {
    %c0 = arith.constant 0 : index
    %c0_0 = arith.constant 0 : index
    %0 = vector.load %arg1[%c0, %c0_0] : memref<8x16xf32, #tpu.memory_space<vmem>>, vector<8x16xf32>
    %c0_1 = arith.constant 0 : index
    %c0_2 = arith.constant 0 : index
    %1 = vector.load %arg2[%c0_1, %c0_2] : memref<16x128xf32, #tpu.memory_space<vmem>>, vector<16x128xf32>
    %cst = arith.constant dense<0.000000e+00> : vector<8x128xf32>
    %2 = tpu.matmul %0, %1, %cst {dimension_numbers = #tpu.dot_dimension_numbers<[1], [0], [0], [1], [0, 0, 1, 1], [], []>} : vector<8x16xf32>, vector<16x128xf32>, vector<8x128xf32> -> vector<8x128xf32>
    %3 = math.sin %2 : vector<8x128xf32>
    %c0_3 = arith.constant 0 : index
    %c0_4 = arith.constant 0 : index
    %4 = vector.load %arg3[%c0_3, %c0_4] : memref<8x256xf32, #tpu.memory_space<vmem>>, vector<8x128xf32>
    tpu.vector_store %arg3[%c0_3, %c0_4], %3 {strides = array<i32>} : memref<8x256xf32, #tpu.memory_space<vmem>>, vector<8x128xf32>,
    %5 = math.cos %2 : vector<8x128xf32>
    %c0_5 = arith.constant 0 : index
    %c128 = arith.constant 128 : index
    %6 = vector.load %arg3[%c0_5, %c128] : memref<8x256xf32, #tpu.memory_space<vmem>>, vector<8x128xf32>
    tpu.vector_store %arg3[%c0_5, %c128], %5 {strides = array<i32>} : memref<8x256xf32, #tpu.memory_space<vmem>>, vector<8x128xf32>,
    return
  }
  func.func @transform_0(%arg0: i32) -> (i32, i32) {
    %c0_i32 = arith.constant 0 : i32
    %c0_i32_0 = arith.constant 0 : i32
    return %arg0, %c0_i32 : i32, i32
  }
  func.func @transform_1(%arg0: i32) -> (i32, i32) {
    %c0_i32 = arith.constant 0 : i32
    %c0_i32_0 = arith.constant 0 : i32
    %c0_i32_1 = arith.constant 0 : i32
    return %c0_i32, %c0_i32_0 : i32, i32
  }
  func.func @transform_2(%arg0: i32) -> (i32, i32) {
    %c0_i32 = arith.constant 0 : i32
    %c0_i32_0 = arith.constant 0 : i32
    return %arg0, %c0_i32 : i32, i32
  }
}

</mosaic_0001>

<llo_original>
// kernel: gaussian_fourier_features.1
$region0: #{gaussian_fourier_features.1}
  #allocation0 [shape = 'u32[]', space=smem, size = 0x4, offset = 0x4, fixed_abs, tag = 'smem constant byte address 0x4 - core index']
  #allocation1 [shape = 'u32[144,128]{1,0:T(1,128)}', space=vmem, size = 0x12000, scoped, tag = 'internal scratch']
  %s0 = inlined_call_operand.vmem [shape: f32[8,16], index: 0, kind: input, shape index: {}]
  %s1 = inlined_call_operand.vmem [shape: f32[16,128], index: 1, kind: input, shape index: {}]
  %s2 = inlined_call_operand.vmem [shape: f32[8,256], index: 2, kind: output, shape index: {}]
  %s3 = sld [smem:[#allocation0]]
  $region18: #{gaussian_fourier_features.1} parent=0
    _
  %s5 = ssub.s32 1, %s3
  %s6 = scalar_select 0, %s5, %s3
  // Predicated region
  $region2: #{gaussian_fourier_features.1} parent=0 // pred_check
    _
  $region3: #{gaussian_fourier_features.1} parent=0 // pred_check_branch
    %8 = sbr.rel (0) target = $region5
  $region4: #{gaussian_fourier_features.1} parent=0 // pred_region
    _
  $region5: #{gaussian_fourier_features.1} parent=0 // pred_fallthru
    _
  // Predicated region
  $region6: #{gaussian_fourier_features.1} parent=0 // pred_check
    _
  $region7: #{gaussian_fourier_features.1} parent=0 // pred_check_branch
    %10 = sbr.rel (0) target = $region9
  $region8: #{gaussian_fourier_features.1} parent=0 // pred_region
    _
  $region9: #{gaussian_fourier_features.1} parent=0 // pred_fallthru
    _
  %v11 = vld [vmem:[%s0] sm:$0xff]
  %v12 = vld [vmem:[%s1] sm:$0xff]
  %v13 = vld [vmem:[%s1 + $0x8] sm:$0xff]
  %vm14 = vcmask 130048
  %v16 = vsel %vm14, %v11, 0
  %18 = vmatprep.subr.mxu0 0.0
  %19 = vmatpush1.msra.mxu0 %v12
  %20 = vmatprep.subr.mxu0 0.0
  %21 = vmatpush1.msra.mxu0 %v13
  %22 = vmatprep.subr.mxu0 0.0
  %23 = vmatpush1.msra.mxu0 0.0
  %24 = vmatprep.subr.mxu0 0.0
  %25 = vmatpush1.msra.mxu0 0.0
  %26 = vmatprep.subr.mxu0 0.0
  %27 = vmatpush1.msra.mxu0 0.0
  %28 = vmatprep.subr.mxu0 0.0
  %29 = vmatpush1.msra.mxu0 0.0
  %30 = vmatprep.subr.mxu0 0.0
  %31 = vmatpush1.msra.mxu0 0.0
  %32 = vmatprep.subr.mxu0 0.0
  %33 = vmatpush1.msra.mxu0 0.0
  %34 = vmatprep.subr.mxu0 0.0
  %35 = vmatpush1.msra.mxu0 0.0
  %36 = vmatprep.subr.mxu0 0.0
  %37 = vmatpush1.msra.mxu0 0.0
  %38 = vmatprep.subr.mxu0 0.0
  %39 = vmatpush1.msra.mxu0 0.0
  %40 = vmatprep.subr.mxu0 0.0
  %41 = vmatpush1.msra.mxu0 0.0
  %42 = vmatprep.subr.mxu0 0.0
  %43 = vmatpush1.msra.mxu0 0.0
  %44 = vmatprep.subr.mxu0 0.0
  %45 = vmatpush1.msra.mxu0 0.0
  %46 = vmatprep.subr.mxu0 0.0
  %47 = vmatpush1.msra.mxu0 0.0
  %48 = vmatprep.subr.mxu0 0.0
  %49 = vmatpush1.msra.mxu0 0.0
  %50 = vmatprep.subr.mxu0 0.0
  %51 = vmatpush1.msra.mxu0 0.0
  %52 = vmatprep.subr.mxu0 0.0
  %53 = vmatpush1.msra.mxu0 0.0
  %54 = vmatprep.subr.mxu0 0.0
  %55 = vmatpush1.msra.mxu0 0.0
  %56 = vmatprep.subr.mxu0 0.0
  %57 = vmatpush1.msra.mxu0 0.0
  %58 = vmatprep.subr.mxu0 0.0
  %59 = vmatpush1.msra.mxu0 0.0
  %60 = vmatprep.subr.mxu0 0.0
  %61 = vmatpush1.msra.mxu0 0.0
  %62 = vmatprep.subr.mxu0 0.0
  %63 = vmatpush1.msra.mxu0 0.0
  %64 = vmatprep.subr.mxu0 0.0
  %65 = vmatpush1.msra.mxu0 0.0
  %66 = vmatprep.subr.mxu0 0.0
  %67 = vmatpush1.msra.mxu0 0.0
  %68 = vmatprep.subr.mxu0 0.0
  %69 = vmatpush1.msra.mxu0 0.0
  %70 = vmatprep.subr.mxu0 0.0
  %71 = vmatpush1.msra.mxu0 0.0
  %72 = vmatprep.subr.mxu0 0.0
  %73 = vmatpush1.msra.mxu0 0.0
  %74 = vmatprep.subr.mxu0 0.0
  %75 = vmatpush1.msra.mxu0 0.0
  %76 = vmatprep.subr.mxu0 0.0
  %77 = vmatpush1.msra.mxu0 0.0
  %78 = vmatprep.subr.mxu0 0.0
  %79 = vmatpush1.msra.mxu0 0.0
  %80 = vmatprep.subr.mxu0 0.0
  %81 = vmatpush1.msra.mxu0 0.0
  %82 = vmatprep.mubr.f32.mxu0 0.0
  %83 = vmatmul.mubr.f32.gmra.mrb[0].mxu0 %v16
  %v84 = vpop.f32.mrb[0].mxu0
  %v85 = vadd.f32 0.0, %v84
  %v86 = vpop.f32.mrb[0].mxu0
  %87 = vdwg.mxu0
  %v88 = vand.u32 2147483647, %v85
  %vm89 = vcmp.le.f32.partialorder %v88, 0.7853982
  %vm90 = vcmp.lt.s32.totalorder %v85, 0
  %v91 = vand.u32 %v85, 2139095040
  %v92 = vshrl.u32 %v91, 23
  %v93 = vsub.s32 %v92, 127
  %v94 = vand.u32 2147483647, %v85
  %v95 = vand.u32 %v94, 8388607
  %v96 = vor.u32 %v95, 8388608
  %v97 = vsub.s32 0, %v96
  %v98 = vadd.s32 %v93, 1
  %vm99 = vcmp.gt.s32.totalorder %v98, 0
  %v100 = vsel %vm99, %v98, 0
  %v101 = vshrl.u32 %v100, 5
  %v102 = vand.u32 %v100, 31
  %v103 = vsub.s32 32, %v102
  %v104 = vshrl.u32 683565275, %v103
  %v105 = vshll.u32 683565275, %v102
  %v106 = vshrl.u32 2475754826, %v103
  %v107 = vor.u32 %v105, %v106
  %v108 = vshll.u32 2475754826, %v102
  %v109 = vshrl.u32 2131351028, %v103
  %v110 = vor.u32 %v108, %v109
  %v111 = vshll.u32 2131351028, %v102
  %v112 = vshrl.u32 2102212464, %v103
  %v113 = vor.u32 %v111, %v112
  %v114 = vshll.u32 2102212464, %v102
  %v115 = vshrl.u32 920167782, %v103
  %v116 = vor.u32 %v114, %v115
  %v117 = vshll.u32 920167782, %v102
  %v118 = vshrl.u32 1326507024, %v103
  %v119 = vor.u32 %v117, %v118
  %vm120 = vcmp.lt.s32.totalorder %v101, 1
  %vm121 = vcmp.lt.s32.totalorder %v101, 2
  %vm122 = vcmp.lt.s32.totalorder %v101, 3
  %vm123 = vcmp.lt.s32.totalorder %v101, 4
  %v124 = vsel %vm120, %v104, %v107
  %v125 = vsel %vm123, %v113, 2102212464
  %v126 = vsel %vm122, %v110, %v125
  %v127 = vsel %vm121, %v124, %v126
  %v128 = vsel %vm120, %v107, %v110
  %v129 = vsel %vm123, %v116, 920167782
  %v130 = vsel %vm122, %v113, %v129
  %v131 = vsel %vm121, %v128, %v130
  %v132 = vsel %vm120, %v110, %v113
  %v133 = vsel %vm123, %v119, 1326507024
  %v134 = vsel %vm122, %v116, %v133
  %v135 = vsel %vm121, %v132, %v134
  %v136 = vshll.u32 %v96, 8
  %v137 = vmul.u32.u64.compose %v136, %v135
  %v138 = vextract.low.u32 %v137
  %v139 = vextract.high.u32 %v137
  %v140 = vmul.u32.u64.compose %v136, %v131
  %v141 = vextract.low.u32 %v140
  %v142 = vextract.high.u32 %v140
  %v143 = vmul.u32 %v136, %v127
  %v144 = vadd.s32 %v139, %v141
  %vm145 = vc.u32 %v139, %v141
  %v146 = vadd.s32 %v142, 1
  %v147 = vsel %vm145, %v146, %v142
  %v148 = vadd.s32 %v143, %v147
  %v149 = vadd.s32 %v148, 536870912
  %v150 = vshrl.u32 %v149, 30
  %v151 = vshll.u32 %v150, 30
  %v152 = vsub.s32 %v148, %v151
  %vm153 = vcmp.lt.s32.totalorder %v152, 0
  %v154 = vsub.s32 0, %v152
  %v155 = vsel %vm153, %v154, %v152
  %v156 = vclz %v155
  %v157 = vsub.s32 %v156, 2
  %vm158 = vcmp.gt.s32.totalorder 0, %v157
  %v159 = vsel %vm158, 0, %v157
  %v160 = vsub.s32 32, %v159
  %v161 = vshll.u32 %v152, %v159
  %v162 = vshrl.u32 %v144, %v160
  %v163 = vor.u32 %v161, %v162
  %v164 = vsub.s32 4294967266, %v159
  %v165 = vadd.s32 %v164, 127
  %v166 = vshll.u32 %v165, 23
  %v167 = vor.u32 4788187, %v166
  %v168 = vand.u32 2147483647, %v167
  %v170 = vcvt.s32.f32 %v163
  %v171 = vmul.f32 %v170, %v168
  %v172 = vxor.u32 %v171, 2147483648
  %v173 = vsel %vm90, %v172, %v171
  %v174 = vsub.s32 4, %v150
  %v175 = vsel %vm90, %v174, %v150
  %v176 = vsel %vm89, %v85, %v173
  %v177 = vsel %vm89, 0, %v175
  %v178 = vcosq.f32.pop %v176
  %v179 = vsinq.f32.pop %v176
  %vm180 = vweird.f32 %v85
  %v181 = vadd.s32 %v177, 3
  %v182 = vand.u32 %v181, 3
  %vm183 = vcmp.lt.s32.totalorder %v182, 2
  %vm184 = vcmp.eq.s32.totalorder %v182, 0
  %v185 = vxor.u32 %v179, 2147483648
  %v186 = vsel %vm184, %v178, %v185
  %vm187 = vcmp.eq.s32.totalorder %v182, 2
  %v188 = vxor.u32 %v178, 2147483648
  %v189 = vsel %vm187, %v188, %v179
  %v190 = vsel %vm183, %v186, %v189
  %v191 = vsel %vm180, nan, %v190
  %192 = vst [vmem:[%s2] sm:$0xff] %v191
  %v193 = vand.u32 2147483647, %v85
  %vm194 = vcmp.le.f32.partialorder %v193, 0.7853982
  %vm195 = vcmp.lt.s32.totalorder %v85, 0
  %v196 = vand.u32 %v85, 2139095040
  %v197 = vshrl.u32 %v196, 23
  %v198 = vsub.s32 %v197, 127
  %v199 = vand.u32 2147483647, %v85
  %v200 = vand.u32 %v199, 8388607
  %v201 = vor.u32 %v200, 8388608
  %v202 = vsub.s32 0, %v201
  %v203 = vadd.s32 %v198, 1
  %vm204 = vcmp.gt.s32.totalorder %v203, 0
  %v205 = vsel %vm204, %v203, 0
  %v206 = vshrl.u32 %v205, 5
  %v207 = vand.u32 %v205, 31
  %v208 = vsub.s32 32, %v207
  %v209 = vshrl.u32 683565275, %v208
  %v210 = vshll.u32 683565275, %v207
  %v211 = vshrl.u32 2475754826, %v208
  %v212 = vor.u32 %v210, %v211
  %v213 = vshll.u32 2475754826, %v207
  %v214 = vshrl.u32 2131351028, %v208
  %v215 = vor.u32 %v213, %v214
  %v216 = vshll.u32 2131351028, %v207
  %v217 = vshrl.u32 2102212464, %v208
  %v218 = vor.u32 %v216, %v217
  %v219 = vshll.u32 2102212464, %v207
  %v220 = vshrl.u32 920167782, %v208
  %v221 = vor.u32 %v219, %v220
  %v222 = vshll.u32 920167782, %v207
  %v223 = vshrl.u32 1326507024, %v208
  %v224 = vor.u32 %v222, %v223
  %vm225 = vcmp.lt.s32.totalorder %v206, 1
  %vm226 = vcmp.lt.s32.totalorder %v206, 2
  %vm227 = vcmp.lt.s32.totalorder %v206, 3
  %vm228 = vcmp.lt.s32.totalorder %v206, 4
  %v229 = vsel %vm225, %v209, %v212
  %v230 = vsel %vm228, %v218, 2102212464
  %v231 = vsel %vm227, %v215, %v230
  %v232 = vsel %vm226, %v229, %v231
  %v233 = vsel %vm225, %v212, %v215
  %v234 = vsel %vm228, %v221, 920167782
  %v235 = vsel %vm227, %v218, %v234
  %v236 = vsel %vm226, %v233, %v235
  %v237 = vsel %vm225, %v215, %v218
  %v238 = vsel %vm228, %v224, 1326507024
  %v239 = vsel %vm227, %v221, %v238
  %v240 = vsel %vm226, %v237, %v239
  %v241 = vshll.u32 %v201, 8
  %v242 = vmul.u32.u64.compose %v241, %v240
  %v243 = vextract.low.u32 %v242
  %v244 = vextract.high.u32 %v242
  %v245 = vmul.u32.u64.compose %v241, %v236
  %v246 = vextract.low.u32 %v245
  %v247 = vextract.high.u32 %v245
  %v248 = vmul.u32 %v241, %v232
  %v249 = vadd.s32 %v244, %v246
  %vm250 = vc.u32 %v244, %v246
  %v251 = vadd.s32 %v247, 1
  %v252 = vsel %vm250, %v251, %v247
  %v253 = vadd.s32 %v248, %v252
  %v254 = vadd.s32 %v253, 536870912
  %v255 = vshrl.u32 %v254, 30
  %v256 = vshll.u32 %v255, 30
  %v257 = vsub.s32 %v253, %v256
  %vm258 = vcmp.lt.s32.totalorder %v257, 0
  %v259 = vsub.s32 0, %v257
  %v260 = vsel %vm258, %v259, %v257
  %v261 = vclz %v260
  %v262 = vsub.s32 %v261, 2
  %vm263 = vcmp.gt.s32.totalorder 0, %v262
  %v264 = vsel %vm263, 0, %v262
  %v265 = vsub.s32 32, %v264
  %v266 = vshll.u32 %v257, %v264
  %v267 = vshrl.u32 %v249, %v265
  %v268 = vor.u32 %v266, %v267
  %v269 = vsub.s32 4294967266, %v264
  %v270 = vadd.s32 %v269, 127
  %v271 = vshll.u32 %v270, 23
  %v272 = vor.u32 4788187, %v271
  %v273 = vand.u32 2147483647, %v272
  %v275 = vcvt.s32.f32 %v268
  %v276 = vmul.f32 %v275, %v273
  %v277 = vxor.u32 %v276, 2147483648
  %v278 = vsel %vm195, %v277, %v276
  %v279 = vsub.s32 4, %v255
  %v280 = vsel %vm195, %v279, %v255
  %v281 = vsel %vm194, %v85, %v278
  %v282 = vsel %vm194, 0, %v280
  %v283 = vcosq.f32.pop %v281
  %v284 = vsinq.f32.pop %v281
  %vm285 = vweird.f32 %v85
  %v286 = vand.u32 %v282, 3
  %vm287 = vcmp.lt.s32.totalorder %v286, 2
  %vm288 = vcmp.eq.s32.totalorder %v286, 0
  %v289 = vxor.u32 %v284, 2147483648
  %v290 = vsel %vm288, %v283, %v289
  %vm291 = vcmp.eq.s32.totalorder %v286, 2
  %v292 = vxor.u32 %v283, 2147483648
  %v293 = vsel %vm291, %v292, %v284
  %v294 = vsel %vm287, %v290, %v293
  %v295 = vsel %vm285, nan, %v294
  %296 = vst [vmem:[%s2 + $0x8] sm:$0xff] %v295
  // Predicated region
  $region10: #{gaussian_fourier_features.1} parent=0 // pred_check
    _
  $region11: #{gaussian_fourier_features.1} parent=0 // pred_check_branch
    %298 = sbr.rel (0) target = $region13
  $region12: #{gaussian_fourier_features.1} parent=0 // pred_region
    _
  $region13: #{gaussian_fourier_features.1} parent=0 // pred_fallthru
    _
  // Predicated region
  $region14: #{gaussian_fourier_features.1} parent=0 // pred_check
    _
  $region15: #{gaussian_fourier_features.1} parent=0 // pred_check_branch
    %300 = sbr.rel (0) target = $region17
  $region16: #{gaussian_fourier_features.1} parent=0 // pred_region
    _
  $region17: #{gaussian_fourier_features.1} parent=0 // pred_fallthru
    _

</llo_original>
